<compile_context>
chip_gen: v7x
topology: tpu7x:2x2x1
jax: 0.10.0
libtpu: 0.0.40
codegen_flags: <defaults>
</compile_context>

<pallas_src>
import functools

import jax
import jax.numpy as jnp
from jax.experimental import pallas as pl
from jax.experimental.pallas import tpu as pltpu

_NEG = -1e30  # padding value for padded vocab columns (drops out of logsumexp)


def _round_up(x, m):
    return (x + m - 1) // m * m


def bigram_kernel(idx_ref, tgt_ref, table_ref, logits_ref, loss_ref, *, n_valid):
    """One tile of tn tokens.

    idx_ref, tgt_ref : (tn, 1)  int32  token / target ids
    table_ref        : (Vp, Vp) f32    padded embedding table (cols >= V are -1e30)
    logits_ref       : (tn, Vp) f32    lane-dense logits tile
    loss_ref         : (tn, 1)  f32    per-row (lse - target_logit), 0 for padded rows
    """
    pid = pl.program_id(0)
    tn = idx_ref.shape[0]
    Vp = table_ref.shape[1]

    idx = idx_ref[...]                                              # (tn, 1) int32
    tgt = tgt_ref[...]                                              # (tn, 1) int32

    # Single column iota reused for both the embedding one-hot and the target select.
    col = jax.lax.broadcasted_iota(jnp.int32, (tn, Vp), 1)          # (tn, Vp)

    # Embedding row gather as one-hot @ table on the MXU (lane-dense, 128-wide).
    onehot = (col == idx).astype(jnp.float32)                       # (tn, Vp)
    logits = jnp.dot(onehot, table_ref[...],
                     preferred_element_type=jnp.float32)            # (tn, Vp)
    logits_ref[...] = logits                                        # full-width store

    # Cross entropy pieces (padded cols are -1e30 -> exp underflows to exactly 0).
    m = jnp.max(logits, axis=-1, keepdims=True)                     # (tn, 1)
    lse = jnp.log(jnp.sum(jnp.exp(logits - m), axis=-1, keepdims=True)) + m
    tgt_logit = jnp.sum(jnp.where(col == tgt, logits, 0.0),
                        axis=-1, keepdims=True)                     # (tn, 1)

    # Mask out rows past the true B*T (N was padded up to a tile multiple).
    row = pid * tn + jax.lax.broadcasted_iota(jnp.int32, (tn, 1), 0)
    valid = (row < n_valid).astype(jnp.float32)

    loss_ref[...] = (lse - tgt_logit) * valid


def bigram_forward(idx, targets, table):
    """idx, targets: (B, T) int token ids; table: (V, V) float32 embedding table.

    Returns (logits (B, T, V) float32, loss () float32) matching the PyTorch module.
    """
    B, T = idx.shape
    V = table.shape[0]
    N = B * T

    # Lane-dense padded vocab width and token-tile size.
    Vp = _round_up(V, 128)
    tn = 128 if N >= 128 else _round_up(N, 8)
    N_pad = _round_up(N, tn)
    G = N_pad // tn

    # Pad inputs.  Padded token rows use id 0 (masked out of the loss in-kernel).
    idx_p = jnp.zeros((N_pad, 1), jnp.int32).at[:N, 0].set(
        idx.reshape(N).astype(jnp.int32))
    tgt_p = jnp.zeros((N_pad, 1), jnp.int32).at[:N, 0].set(
        targets.reshape(N).astype(jnp.int32))

    # Pad table to (Vp, Vp): padded columns of real rows get -1e30 so they vanish
    # from max/logsumexp; padded rows are never selected by the one-hot (ids < V).
    table_p = jnp.zeros((Vp, Vp), jnp.float32)
    table_p = table_p.at[:V, :V].set(table.astype(jnp.float32))
    table_p = table_p.at[:V, V:].set(_NEG)

    logits_p, loss_terms = pl.pallas_call(
        functools.partial(bigram_kernel, n_valid=N),
        out_shape=(
            jax.ShapeDtypeStruct((N_pad, Vp), jnp.float32),
            jax.ShapeDtypeStruct((N_pad, 1), jnp.float32),
        ),
        grid=(G,),
        in_specs=[
            pl.BlockSpec((tn, 1), lambda i: (i, 0)),      # idx tile
            pl.BlockSpec((tn, 1), lambda i: (i, 0)),      # targets tile
            pl.BlockSpec((Vp, Vp), lambda i: (0, 0)),     # table: resident across tiles
        ],
        out_specs=(
            pl.BlockSpec((tn, Vp), lambda i: (i, 0)),     # lane-dense logits tile
            pl.BlockSpec((tn, 1), lambda i: (i, 0)),      # per-row loss terms
        ),
        compiler_params=pltpu.CompilerParams(
            dimension_semantics=("parallel",),            # independent tiles -> megacore
            vmem_limit_bytes=32 * 1024 * 1024,
        ),
    )(idx_p, tgt_p, table_p)

    logits = logits_p[:N, :V].reshape(B, T, V)
    loss = jnp.sum(loss_terms) / N                        # single final divide
    return logits, loss


if __name__ == "__main__":
    key = jax.random.PRNGKey(0)
    k_tab, k_idx, k_tgt = jax.random.split(key, 3)

    vocab_size = 64
    B, T = 2, 8

    # nn.Embedding default init: N(0, 1)
    table = jax.random.normal(k_tab, (vocab_size, vocab_size), dtype=jnp.float32)
    idx = jax.random.randint(k_idx, (B, T), 0, vocab_size, dtype=jnp.int32)
    targets = jax.random.randint(k_tgt, (B, T), 0, vocab_size, dtype=jnp.int32)

    logits, loss = bigram_forward(idx, targets, table)
    jax.block_until_ready((logits, loss))

    # Pure-JAX reference check
    ref_logits = table[idx]                                   # (B, T, V)
    lf = ref_logits.reshape(B * T, vocab_size)
    tf = targets.reshape(B * T)
    ref_loss = jnp.mean(
        jax.nn.logsumexp(lf, axis=-1) - lf[jnp.arange(B * T), tf])

    assert logits.shape == (B, T, vocab_size)
    assert jnp.allclose(logits, ref_logits, atol=1e-5, rtol=1e-5)
    assert jnp.allclose(loss, ref_loss, atol=1e-5, rtol=1e-5)

    print("KERNEL_OK")
</pallas_src>

<mosaic_0001>
module attributes {stable_mosaic.version = 11 : i64} {
  func.func @bigram_kernel(%arg0: i32, %arg1: memref<16x1xi32, #tpu.memory_space<vmem>>, %arg2: memref<16x1xi32, #tpu.memory_space<vmem>>, %arg3: memref<128x128xf32, #tpu.memory_space<vmem>>, %arg4: memref<16x128xf32, #tpu.memory_space<vmem>>, %arg5: memref<16x1xf32, #tpu.memory_space<vmem>>) attributes {dimension_semantics = [#tpu.dimension_semantics<parallel>], iteration_bounds = array<i64: 1>, scalar_prefetch = 0 : i64, scratch_operands = 0 : i64, tpu.core_type = #tpu.core_type<tc>, window_params = [{transform_indices = @transform_0, window_bounds = array<i64: 16, 1>}, {transform_indices = @transform_1, window_bounds = array<i64: 16, 1>}, {pipeline_mode = #tpu.pipeline_mode<synchronous>, transform_indices = @transform_2, window_bounds = array<i64: 128, 128>}, {transform_indices = @transform_3, window_bounds = array<i64: 16, 128>}, {transform_indices = @transform_4, window_bounds = array<i64: 16, 1>}]} {
    %c0 = arith.constant 0 : index
    %c0_0 = arith.constant 0 : index
    %0 = vector.load %arg1[%c0, %c0_0] : memref<16x1xi32, #tpu.memory_space<vmem>>, vector<16x1xi32>
    %c0_1 = arith.constant 0 : index
    %c0_2 = arith.constant 0 : index
    %1 = vector.load %arg2[%c0_1, %c0_2] : memref<16x1xi32, #tpu.memory_space<vmem>>, vector<16x1xi32>
    %2 = tpu.iota {dimensions = array<i32: 1>} : vector<16x128xi32>
    %3 = vector.broadcast %0 : vector<16x1xi32> to vector<16x128xi32>
    %4 = arith.cmpi eq, %2, %3 : vector<16x128xi32>
    %5 = arith.extui %4 : vector<16x128xi1> to vector<16x128xi32>
    %6 = arith.sitofp %5 : vector<16x128xi32> to vector<16x128xf32>
    %c0_3 = arith.constant 0 : index
    %c0_4 = arith.constant 0 : index
    %7 = vector.load %arg3[%c0_3, %c0_4] : memref<128x128xf32, #tpu.memory_space<vmem>>, vector<128x128xf32>
    %cst = arith.constant dense<0.000000e+00> : vector<16x128xf32>
    %8 = tpu.matmul %6, %7, %cst {dimension_numbers = #tpu.dot_dimension_numbers<[1], [0], [0], [1], [0, 0, 1, 1], [], []>} : vector<16x128xf32>, vector<128x128xf32>, vector<16x128xf32> -> vector<16x128xf32>
    %c0_5 = arith.constant 0 : index
    %c0_6 = arith.constant 0 : index
    %9 = vector.load %arg4[%c0_5, %c0_6] : memref<16x128xf32, #tpu.memory_space<vmem>>, vector<16x128xf32>
    tpu.vector_store %arg4[%c0_5, %c0_6], %8 {strides = array<i32>} : memref<16x128xf32, #tpu.memory_space<vmem>>, vector<16x128xf32>,
    %cst_7 = arith.constant dense<0xFF800000> : vector<16xf32>
    %10 = vector.multi_reduction <maximumf>, %8, %cst_7 [1] : vector<16x128xf32> to vector<16xf32>
    %11 = vector.shape_cast %10 : vector<16xf32> to vector<16x1xf32>
    %12 = vector.broadcast %11 : vector<16x1xf32> to vector<16x128xf32>
    %13 = arith.subf %8, %12 : vector<16x128xf32>
    %14 = math.exp %13 : vector<16x128xf32>
    %cst_8 = arith.constant dense<0.000000e+00> : vector<16xf32>
    %15 = vector.multi_reduction <add>, %14, %cst_8 [1] : vector<16x128xf32> to vector<16xf32>
    %16 = vector.shape_cast %15 : vector<16xf32> to vector<16x1xf32>
    %17 = math.log %16 : vector<16x1xf32>
    %18 = arith.addf %17, %11 : vector<16x1xf32>
    %19 = vector.broadcast %1 : vector<16x1xi32> to vector<16x128xi32>
    %20 = arith.cmpi eq, %2, %19 : vector<16x128xi32>
    %cst_9 = arith.constant 0.000000e+00 : f32
    %21 = vector.broadcast %cst_9 : f32 to vector<16x128xf32>
    %22 = arith.select %20, %8, %21 : vector<16x128xi1>, vector<16x128xf32>
    %cst_10 = arith.constant dense<0.000000e+00> : vector<16xf32>
    %23 = vector.multi_reduction <add>, %22, %cst_10 [1] : vector<16x128xf32> to vector<16xf32>
    %24 = vector.shape_cast %23 : vector<16xf32> to vector<16x1xf32>
    %c16_i32 = arith.constant 16 : i32
    %25 = arith.muli %arg0, %c16_i32 : i32
    %26 = tpu.iota {dimensions = array<i32: 0>} : vector<16x1xi32>
    %27 = vector.broadcast %25 : i32 to vector<16x1xi32>
    %28 = arith.addi %27, %26 : vector<16x1xi32>
    %c16_i32_11 = arith.constant 16 : i32
    %29 = vector.broadcast %c16_i32_11 : i32 to vector<16x1xi32>
    %30 = arith.cmpi slt, %28, %29 : vector<16x1xi32>
    %31 = arith.extui %30 : vector<16x1xi1> to vector<16x1xi32>
    %32 = arith.sitofp %31 : vector<16x1xi32> to vector<16x1xf32>
    %33 = arith.subf %18, %24 : vector<16x1xf32>
    %34 = arith.mulf %33, %32 : vector<16x1xf32>
    %c0_12 = arith.constant 0 : index
    %c0_13 = arith.constant 0 : index
    %35 = vector.load %arg5[%c0_12, %c0_13] : memref<16x1xf32, #tpu.memory_space<vmem>>, vector<16x1xf32>
    tpu.vector_store %arg5[%c0_12, %c0_13], %34 {strides = array<i32>} : memref<16x1xf32, #tpu.memory_space<vmem>>, vector<16x1xf32>,
    return
  }
  func.func @transform_0(%arg0: i32) -> (i32, i32) {
    %c0_i32 = arith.constant 0 : i32
    %c0_i32_0 = arith.constant 0 : i32
    return %arg0, %c0_i32 : i32, i32
  }
  func.func @transform_1(%arg0: i32) -> (i32, i32) {
    %c0_i32 = arith.constant 0 : i32
    %c0_i32_0 = arith.constant 0 : i32
    return %arg0, %c0_i32 : i32, i32
  }
  func.func @transform_2(%arg0: i32) -> (i32, i32) {
    %c0_i32 = arith.constant 0 : i32
    %c0_i32_0 = arith.constant 0 : i32
    %c0_i32_1 = arith.constant 0 : i32
    return %c0_i32, %c0_i32_0 : i32, i32
  }
  func.func @transform_3(%arg0: i32) -> (i32, i32) {
    %c0_i32 = arith.constant 0 : i32
    %c0_i32_0 = arith.constant 0 : i32
    return %arg0, %c0_i32 : i32, i32
  }
  func.func @transform_4(%arg0: i32) -> (i32, i32) {
    %c0_i32 = arith.constant 0 : i32
    %c0_i32_0 = arith.constant 0 : i32
    return %arg0, %c0_i32 : i32, i32
  }
}

</mosaic_0001>

<llo_original>
// kernel: tpu_custom_call.1
$region0: #{tpu_custom_call.1}
  #allocation0 [shape = 'u32[]', space=smem, size = 0x4, offset = 0x4, fixed_abs, tag = 'smem constant byte address 0x4 - core index']
  #allocation1 [shape = 'u32[144,128]{1,0:T(1,128)}', space=vmem, size = 0x12000, scoped, tag = 'internal scratch']
  %s0 = inlined_call_operand.vmem [shape: s32[16,1], index: 0, kind: input, shape index: {}]
  %s1 = inlined_call_operand.vmem [shape: s32[16,1], index: 1, kind: input, shape index: {}]
  %s2 = inlined_call_operand.hbm [shape: f32[128,128], index: 2, kind: input, shape index: {}]
  %s3 = inlined_call_operand.hbm [shape: f32[16,128], index: 3, kind: output, shape index: {0}]
  %s4 = inlined_call_operand.vmem [shape: f32[16,1], index: 4, kind: output, shape index: {1}]
  %5 = xla_tuple %s3, %s4
  %s6 = sld [smem:[#allocation0]]
  $region34: #{tpu_custom_call.1} parent=0
    _
  %s8 = ssub.s32 1, %s6
  %s9 = scalar_select 0, %s8, %s6
  $region1: #{tpu_custom_call.1} parent=0
    #allocation2 [shape = 'u8[65536]{0}', space=vmem, size = 0x10000, scoped, tag = 'input window, operand 2, single buffered']
    #allocation3 [shape = 's32[1]{0}', space=sflag, size = 0x4, scoped, tag = 'scoped memory for tpu_custom_call.1']
    #allocation4 [shape = 's32[1]{0}', space=sflag, size = 0x4, scoped, tag = 'scoped memory for tpu_custom_call.1']
    #allocation5 [shape = 'u8[8192]{0}', space=vmem, size = 0x2000, scoped, tag = 'output window, operand 0, single buffered']
    %10 = vsyncpa [#allocation3], 0
    %11 = vsyncpa [#allocation4], 0
    // Predicated region
    $region2: #{tpu_custom_call.1} parent=1 // pred_check
      _
    $region3: #{tpu_custom_call.1} parent=1 // pred_check_branch
      %13 = sbr.rel (0) target = $region5
    $region4: #{tpu_custom_call.1} parent=1 // pred_region
      _
    $region5: #{tpu_custom_call.1} parent=1 // pred_fallthru
      _
    // Predicated region
    $region6: #{tpu_custom_call.1} parent=1 // pred_check
      _
    $region7: #{tpu_custom_call.1} parent=1 // pred_check_branch
      %15 = sbr.rel (0) target = $region9
    $region8: #{tpu_custom_call.1} parent=1 // pred_region
      _
    $region9: #{tpu_custom_call.1} parent=1 // pred_fallthru
      _
    // Predicated region
    $region10: #{tpu_custom_call.1} parent=1 // pred_check
      _
    $region11: #{tpu_custom_call.1} parent=1 // pred_check_branch
      %17 = sbr.rel (0) target = $region13
    $region12: #{tpu_custom_call.1} parent=1 // pred_region
      %s19 = ssub.s32 2048, 2048
      %20 = vsyncadd [#allocation3], %s19
      %s21 = sshll.u32 [#allocation2], 4
      %s22 = int_to_ptr.vmem [resolvable:$true] %s21
      %27 = dma.hbm_to_vmem [thread:$0]  %s2, 2048, %s22, [#allocation3], 128, 128, 8
    $region13: #{tpu_custom_call.1} parent=1 // pred_fallthru
      _
    // Predicated region
    $region14: #{tpu_custom_call.1} parent=1 // pred_check
      _
    $region15: #{tpu_custom_call.1} parent=1 // pred_check_branch
      %29 = sbr.rel (0) target = $region17
    $region16: #{tpu_custom_call.1} parent=1 // pred_region
      %30 = dma.done [#allocation3], 2048
    $region17: #{tpu_custom_call.1} parent=1 // pred_fallthru
      _
    %v31 = vld [vmem:[%s0] sm:$0xff]
    %v32 = vld [vmem:[%s0 + $0x8] sm:$0xff]
    %v33 = vld [vmem:[%s1] sm:$0xff]
    %v34 = vld [vmem:[%s1 + $0x8] sm:$0xff]
    %v35 = vlaneseq
    %v36 = vand.u32 %v35, 127
    %37 = vset.pattern.permute.xlu0 0
    %38 = vperm.xlu0 %37, %v31
    %v39 = vpop.permute.xlu0 %38
    %40 = vset.pattern.permute.xlu0 0
    %41 = vperm.xlu0 %40, %v32
    %v42 = vpop.permute.xlu0 %41
    %vm43 = vcmp.eq.s32.totalorder %v36, %v39
    %vm44 = vcmp.eq.s32.totalorder %v36, %v42
    %v45 = vsel %vm43, 1, 0
    %v46 = vsel %vm44, 1, 0
    %v47 = vcvt.s32.f32 %v45
    %v48 = vcvt.s32.f32 %v46
    %v49 = vld [vmem:[#allocation2] sm:$0xff]
    %v50 = vld [vmem:[#allocation2 + $0x8] sm:$0xff]
    %v51 = vld [vmem:[#allocation2 + $0x10] sm:$0xff]
    %v52 = vld [vmem:[#allocation2 + $0x18] sm:$0xff]
    %v53 = vld [vmem:[#allocation2 + $0x20] sm:$0xff]
    %v54 = vld [vmem:[#allocation2 + $0x28] sm:$0xff]
    %v55 = vld [vmem:[#allocation2 + $0x30] sm:$0xff]
    %v56 = vld [vmem:[#allocation2 + $0x38] sm:$0xff]
    %v57 = vld [vmem:[#allocation2 + $0x40] sm:$0xff]
    %v58 = vld [vmem:[#allocation2 + $0x48] sm:$0xff]
    %v59 = vld [vmem:[#allocation2 + $0x50] sm:$0xff]
    %v60 = vld [vmem:[#allocation2 + $0x58] sm:$0xff]
    %v61 = vld [vmem:[#allocation2 + $0x60] sm:$0xff]
    %v62 = vld [vmem:[#allocation2 + $0x68] sm:$0xff]
    %v63 = vld [vmem:[#allocation2 + $0x70] sm:$0xff]
    %v64 = vld [vmem:[#allocation2 + $0x78] sm:$0xff]
    %65 = vmatprep.subr.mxu0 0.0
    %66 = vmatpush1.msra.mxu0 %v49
    %67 = vmatprep.subr.mxu0 0.0
    %68 = vmatpush1.msra.mxu0 %v50
    %69 = vmatprep.subr.mxu0 0.0
    %70 = vmatpush1.msra.mxu0 %v51
    %71 = vmatprep.subr.mxu0 0.0
    %72 = vmatpush1.msra.mxu0 %v52
    %73 = vmatprep.subr.mxu0 0.0
    %74 = vmatpush1.msra.mxu0 %v53
    %75 = vmatprep.subr.mxu0 0.0
    %76 = vmatpush1.msra.mxu0 %v54
    %77 = vmatprep.subr.mxu0 0.0
    %78 = vmatpush1.msra.mxu0 %v55
    %79 = vmatprep.subr.mxu0 0.0
    %80 = vmatpush1.msra.mxu0 %v56
    %81 = vmatprep.subr.mxu0 0.0
    %82 = vmatpush1.msra.mxu0 %v57
    %83 = vmatprep.subr.mxu0 0.0
    %84 = vmatpush1.msra.mxu0 %v58
    %85 = vmatprep.subr.mxu0 0.0
    %86 = vmatpush1.msra.mxu0 %v59
    %87 = vmatprep.subr.mxu0 0.0
    %88 = vmatpush1.msra.mxu0 %v60
    %89 = vmatprep.subr.mxu0 0.0
    %90 = vmatpush1.msra.mxu0 %v61
    %91 = vmatprep.subr.mxu0 0.0
    %92 = vmatpush1.msra.mxu0 %v62
    %93 = vmatprep.subr.mxu0 0.0
    %94 = vmatpush1.msra.mxu0 %v63
    %95 = vmatprep.subr.mxu0 0.0
    %96 = vmatpush1.msra.mxu0 %v64
    %97 = vmatprep.subr.mxu0 0.0
    %98 = vmatpush1.msra.mxu0 0.0
    %99 = vmatprep.subr.mxu0 0.0
    %100 = vmatpush1.msra.mxu0 0.0
    %101 = vmatprep.subr.mxu0 0.0
    %102 = vmatpush1.msra.mxu0 0.0
    %103 = vmatprep.subr.mxu0 0.0
    %104 = vmatpush1.msra.mxu0 0.0
    %105 = vmatprep.subr.mxu0 0.0
    %106 = vmatpush1.msra.mxu0 0.0
    %107 = vmatprep.subr.mxu0 0.0
    %108 = vmatpush1.msra.mxu0 0.0
    %109 = vmatprep.subr.mxu0 0.0
    %110 = vmatpush1.msra.mxu0 0.0
    %111 = vmatprep.subr.mxu0 0.0
    %112 = vmatpush1.msra.mxu0 0.0
    %113 = vmatprep.subr.mxu0 0.0
    %114 = vmatpush1.msra.mxu0 0.0
    %115 = vmatprep.subr.mxu0 0.0
    %116 = vmatpush1.msra.mxu0 0.0
    %117 = vmatprep.subr.mxu0 0.0
    %118 = vmatpush1.msra.mxu0 0.0
    %119 = vmatprep.subr.mxu0 0.0
    %120 = vmatpush1.msra.mxu0 0.0
    %121 = vmatprep.subr.mxu0 0.0
    %122 = vmatpush1.msra.mxu0 0.0
    %123 = vmatprep.subr.mxu0 0.0
    %124 = vmatpush1.msra.mxu0 0.0
    %125 = vmatprep.subr.mxu0 0.0
    %126 = vmatpush1.msra.mxu0 0.0
    %127 = vmatprep.subr.mxu0 0.0
    %128 = vmatpush1.msra.mxu0 0.0
    %129 = vmatprep.mubr.f32.mxu0 0.0
    %130 = vmatmul.mubr.f32.gmra.mrb[0].mxu0 %v47
    %v131 = vpop.f32.mrb[0].mxu0
    %v132 = vadd.f32 0.0, %v131
    %v133 = vpop.f32.mrb[0].mxu0
    %134 = vmatprep.mubr.f32.mxu0 0.0
    %135 = vmatmul.mubr.f32.gmra.mrb[0].mxu0 %v48
    %v136 = vpop.f32.mrb[0].mxu0
    %v137 = vadd.f32 0.0, %v136
    %v138 = vpop.f32.mrb[0].mxu0
    %139 = vdwg.mxu0
    %140 = vst [vmem:[#allocation5] sm:$0xff] %v132
    %141 = vst [vmem:[#allocation5 + $0x8] sm:$0xff] %v137
    %142 = vmax.xlane.f32.xlu0 %v132
    %v143 = vpop.xlane.xlu0 %142
    %144 = vmax.xlane.f32.xlu0 %v137
    %v145 = vpop.xlane.xlu0 %144
    %v146 = vsub.f32 %v132, %v143
    %v147 = vsub.f32 %v137, %v145
    %v148 = vmul.f32 %v146, 1.442695
    %v149 = vpow.pop %v148
    %v150 = vmul.f32 %v147, 1.442695
    %v151 = vpow.pop %v150
    %152 = vadd.xlane.f32.xlu0 %v149
    %v153 = vpop.xlane.xlu0 %152
    %154 = vadd.xlane.f32.xlu0 %v151
    %v155 = vpop.xlane.xlu0 %154
    %v156 = vlog2.pop %v153
    %v157 = vmul.f32 %v156, 0.6931472
    %v158 = vlog2.pop %v155
    %v159 = vmul.f32 %v158, 0.6931472
    %v160 = vadd.f32 %v157, %v143
    %v161 = vadd.f32 %v159, %v145
    %162 = vset.pattern.permute.xlu0 0
    %163 = vperm.xlu0 %162, %v33
    %v164 = vpop.permute.xlu0 %163
    %165 = vset.pattern.permute.xlu0 0
    %166 = vperm.xlu0 %165, %v34
    %v167 = vpop.permute.xlu0 %166
    %vm168 = vcmp.eq.s32.totalorder %v36, %v164
    %vm169 = vcmp.eq.s32.totalorder %v36, %v167
    %v170 = vsel %vm168, %v132, 0.0
    %v171 = vsel %vm169, %v137, 0.0
    %172 = vadd.xlane.f32.xlu0 %v170
    %v173 = vpop.xlane.xlu0 %172
    %174 = vadd.xlane.f32.xlu0 %v171
    %v175 = vpop.xlane.xlu0 %174
    %s176 = smul.u32 0, 16
    %v177 = vlaneseq
    %v178 = vshrl.u32 %v177, 7
    %v179 = vadd.s32 %v178, 8
    %v180 = vstv %s176
    %v181 = vadd.s32 %v180, %v178
    %v182 = vadd.s32 %v180, %v179
    %vm183 = vcmp.lt.s32.totalorder %v181, 16
    %vm184 = vcmp.lt.s32.totalorder %v182, 16
    %v185 = vsel %vm183, 1, 0
    %v186 = vsel %vm184, 1, 0
    %v187 = vcvt.s32.f32 %v185
    %v188 = vcvt.s32.f32 %v186
    %v189 = vsub.f32 %v160, %v173
    %v190 = vsub.f32 %v161, %v175
    %v191 = vmul.f32 %v189, %v187
    %v192 = vmul.f32 %v190, %v188
    %vm193 = vcmask 7168
    %194 = vst.msk [vmem:[%s4] sm:$0xff] %vm193, %v191
    %195 = vst.msk [vmem:[%s4 + $0x8] sm:$0xff] %vm193, %v192
    // Predicated region
    $region18: #{tpu_custom_call.1} parent=1 // pred_check
      _
    $region19: #{tpu_custom_call.1} parent=1 // pred_check_branch
      %197 = sbr.rel (0) target = $region21
    $region20: #{tpu_custom_call.1} parent=1 // pred_region
      %s199 = ssub.s32 256, 256
      %200 = vsyncadd [#allocation4], %s199
      %s201 = sshll.u32 [#allocation5], 4
      %s202 = int_to_ptr.vmem [resolvable:$true] %s201
      %207 = dma.vmem_to_hbm [thread:$0]  %s202, 256, %s3, [#allocation4], 128, 128, 8
    $region21: #{tpu_custom_call.1} parent=1 // pred_fallthru
      _
    // Predicated region
    $region22: #{tpu_custom_call.1} parent=1 // pred_check
      _
    $region23: #{tpu_custom_call.1} parent=1 // pred_check_branch
      %209 = sbr.rel (0) target = $region25
    $region24: #{tpu_custom_call.1} parent=1 // pred_region
      _
    $region25: #{tpu_custom_call.1} parent=1 // pred_fallthru
      _
    // Predicated region
    $region26: #{tpu_custom_call.1} parent=1 // pred_check
      _
    $region27: #{tpu_custom_call.1} parent=1 // pred_check_branch
      %211 = sbr.rel (0) target = $region29
    $region28: #{tpu_custom_call.1} parent=1 // pred_region
      %212 = dma.done [#allocation4], 256
    $region29: #{tpu_custom_call.1} parent=1 // pred_fallthru
      _
    // Predicated region
    $region30: #{tpu_custom_call.1} parent=1 // pred_check
      _
    $region31: #{tpu_custom_call.1} parent=1 // pred_check_branch
      %214 = sbr.rel (0) target = $region33
    $region32: #{tpu_custom_call.1} parent=1 // pred_region
      _
    $region33: #{tpu_custom_call.1} parent=1 // pred_fallthru
      _
    %215 = vsyncpa [#allocation3], 1
    %216 = vsyncpa [#allocation4], 1

</llo_original>
